<compile_context>
chip_gen: v6e
topology: v6e:2x2x1
jax: 0.10.0
libtpu: 0.0.40
codegen_flags: <defaults>
</compile_context>

<pallas_src>
import jax
import jax.numpy as jnp
from jax.experimental import pallas as pl
from jax.experimental.pallas import tpu as pltpu


def _fusion_kernel(scal_ref,       # SMEM (4,): [w_bm_a/3, bias_a, w_bm_v/3, bias_v]
                   wa_self_ref,    # VMEM (Ca, 1)  a-branch weight on audio features (pre /3)
                   wa_other_ref,   # VMEM (Cv, 1)  a-branch weight on video features (pre /3)
                   wv_self_ref,    # VMEM (Cv, 1)  v-branch weight on video features (pre /3)
                   wv_other_ref,   # VMEM (Ca, 1)  v-branch weight on audio features (pre /3)
                   vf_ref,         # VMEM (B, Cv, Tt) video features, NCT
                   af_ref,         # VMEM (B, Ca, Tt) audio features, NCT
                   vcfg_ref,       # VMEM (B, Tt)
                   acfg_ref,       # VMEM (B, Tt)
                   out_ref):       # VMEM (B, Tt)
    vf = vf_ref[...].astype(jnp.float32)      # (B, Cv, Tt)
    af = af_ref[...].astype(jnp.float32)      # (B, Ca, Tt)
    vcfg = vcfg_ref[...].astype(jnp.float32)  # (B, Tt)
    acfg = acfg_ref[...].astype(jnp.float32)  # (B, Tt)

    # Channel contractions: VPU multiply + sublane (XLU) reduce; T stays on lanes.
    sa = jnp.sum(af * wa_self_ref[...], axis=1)     # (B, Tt)
    oa = jnp.sum(vf * wa_other_ref[...], axis=1)    # (B, Tt)
    a_attn = jax.nn.sigmoid(acfg * scal_ref[0] + scal_ref[1] + sa + oa)

    sv = jnp.sum(vf * wv_self_ref[...], axis=1)     # (B, Tt)
    ov = jnp.sum(af * wv_other_ref[...], axis=1)    # (B, Tt)
    v_attn = jax.nn.sigmoid(vcfg * scal_ref[2] + scal_ref[3] + sv + ov)

    inv_s = pl.reciprocal(a_attn + v_attn)          # one divide instead of two
    out_ref[...] = ((vcfg * v_attn + acfg * a_attn) * inv_s).astype(out_ref.dtype)


def _pick_tile_t(T: int) -> int:
    # Largest lane-dense tile (<=1024, keeps double-buffered footprint well under
    # the default scoped-VMEM limit on v5e/v6e/v7x) that divides T.
    for cand in (1024, 512, 256, 128):
        if T % cand == 0:
            return cand
    # TODO(synk): pad + mask tail tiles for large T not divisible by 128.
    return T  # ragged / small T: single full-extent tile along T


def init_params(key, n_video_features, n_audio_features):
    """Deterministic synthetic parameters matching the Conv1d shapes."""
    ks = jax.random.split(key, 12)
    f32 = jnp.float32
    return {
        # a_attn_block = ModalCbgAttnBlock(n_audio_features, n_video_features)
        "a_self_w":  jax.random.normal(ks[0], (n_audio_features,), f32) * 0.1,
        "a_self_b":  jax.random.normal(ks[1], (), f32) * 0.1,
        "a_other_w": jax.random.normal(ks[2], (n_video_features,), f32) * 0.1,
        "a_other_b": jax.random.normal(ks[3], (), f32) * 0.1,
        "a_bm_w":    jax.random.normal(ks[4], (), f32) * 0.1,
        "a_bm_b":    jax.random.normal(ks[5], (), f32) * 0.1,
        # v_attn_block = ModalCbgAttnBlock(n_video_features, n_audio_features)
        "v_self_w":  jax.random.normal(ks[6], (n_video_features,), f32) * 0.1,
        "v_self_b":  jax.random.normal(ks[7], (), f32) * 0.1,
        "v_other_w": jax.random.normal(ks[8], (n_audio_features,), f32) * 0.1,
        "v_other_b": jax.random.normal(ks[9], (), f32) * 0.1,
        "v_bm_w":    jax.random.normal(ks[10], (), f32) * 0.1,
        "v_bm_b":    jax.random.normal(ks[11], (), f32) * 0.1,
    }


def modal_feature_attn_cfg_fusion(params, video_feature, audio_feature,
                                  video_cfg, audio_cfg):
    """
    Args (native PyTorch NCT layout — no transposes):
      video_feature: (B, C_v, T)  float (f32 or bf16)
      audio_feature: (B, C_a, T)  float (f32 or bf16)
      video_cfg:     (B, T)       float
      audio_cfg:     (B, T)       float
    Returns: (B, T) f32
    """
    B, Cv, T = video_feature.shape
    Ca = audio_feature.shape[1]
    tile_t = _pick_tile_t(T)
    grid = (T // tile_t,)

    third = jnp.float32(1.0 / 3.0)
    # Fold 1/3 into the weights and collapse the 3 per-branch biases into one.
    wa_self = (params["a_self_w"] * third).reshape(Ca, 1).astype(jnp.float32)
    wa_other = (params["a_other_w"] * third).reshape(Cv, 1).astype(jnp.float32)
    wv_self = (params["v_self_w"] * third).reshape(Cv, 1).astype(jnp.float32)
    wv_other = (params["v_other_w"] * third).reshape(Ca, 1).astype(jnp.float32)
    scalars = jnp.stack([
        params["a_bm_w"] * third,
        (params["a_bm_b"] + params["a_self_b"] + params["a_other_b"]) * third,
        params["v_bm_w"] * third,
        (params["v_bm_b"] + params["v_self_b"] + params["v_other_b"]) * third,
    ]).astype(jnp.float32)                       # (4,)

    itemsize = jnp.dtype(video_feature.dtype).itemsize
    bytes_accessed = (video_feature.size + audio_feature.size) * itemsize \
        + (video_cfg.size + audio_cfg.size + B * T) * 4
    cost = pl.CostEstimate(
        flops=2 * B * T * (Ca + Cv) + 16 * B * T,
        transcendentals=2 * B * T,
        bytes_accessed=bytes_accessed,
    )

    smem = pl.BlockSpec(memory_space=pltpu.MemorySpace.SMEM)
    cfg_spec = pl.BlockSpec((B, tile_t), lambda t: (0, t))

    out = pl.pallas_call(
        _fusion_kernel,
        out_shape=jax.ShapeDtypeStruct((B, T), jnp.float32),
        grid=grid,
        in_specs=[
            smem,                                                  # scalars
            pl.BlockSpec((Ca, 1), lambda t: (0, 0)),               # wa_self
            pl.BlockSpec((Cv, 1), lambda t: (0, 0)),               # wa_other
            pl.BlockSpec((Cv, 1), lambda t: (0, 0)),               # wv_self
            pl.BlockSpec((Ca, 1), lambda t: (0, 0)),               # wv_other
            pl.BlockSpec((B, Cv, tile_t), lambda t: (0, 0, t)),    # video features
            pl.BlockSpec((B, Ca, tile_t), lambda t: (0, 0, t)),    # audio features
            cfg_spec,                                              # video_cfg
            cfg_spec,                                              # audio_cfg
        ],
        out_specs=cfg_spec,
        compiler_params=pltpu.CompilerParams(
            dimension_semantics=("parallel",)),
        cost_estimate=cost,
    )(scalars, wa_self, wa_other, wv_self, wv_other,
      video_feature, audio_feature, video_cfg, audio_cfg)
    return out


def _reference_forward(params, video_feature, audio_feature, video_cfg, audio_cfg):
    """Pure-JAX reference mirroring the PyTorch module exactly (NCT layout)."""
    def cbg_block(self_bm, self_feat, another_feat, w_self, b_self,
                  w_other, b_other, w_bm, b_bm):
        w_bm_out = self_bm * w_bm + b_bm
        w_self_out = jnp.einsum("c,bct->bt", w_self, self_feat) + b_self
        w_other_out = jnp.einsum("c,bct->bt", w_other, another_feat) + b_other
        return jax.nn.sigmoid((w_bm_out + w_self_out + w_other_out) / 3.0)

    a_attn = cbg_block(audio_cfg, audio_feature, video_feature,
                       params["a_self_w"], params["a_self_b"],
                       params["a_other_w"], params["a_other_b"],
                       params["a_bm_w"], params["a_bm_b"])
    v_attn = cbg_block(video_cfg, video_feature, audio_feature,
                       params["v_self_w"], params["v_self_b"],
                       params["v_other_w"], params["v_other_b"],
                       params["v_bm_w"], params["v_bm_b"])
    s = a_attn + v_attn
    return video_cfg * (v_attn / s) + audio_cfg * (a_attn / s)


if __name__ == "__main__":
    # Small but multi-tile demo: T=384 -> 3 grid steps of tile_t=128.
    B, Cv, Ca, T = 2, 12, 10, 384

    key = jax.random.PRNGKey(0)
    k_params, k_vf, k_af, k_vc, k_ac = jax.random.split(key, 5)

    params = init_params(k_params, n_video_features=Cv, n_audio_features=Ca)

    video_feature = jax.random.normal(k_vf, (B, Cv, T), jnp.float32)
    audio_feature = jax.random.normal(k_af, (B, Ca, T), jnp.float32)
    video_cfg = jax.nn.sigmoid(jax.random.normal(k_vc, (B, T), jnp.float32))
    audio_cfg = jax.nn.sigmoid(jax.random.normal(k_ac, (B, T), jnp.float32))

    out = modal_feature_attn_cfg_fusion(params, video_feature, audio_feature,
                                        video_cfg, audio_cfg)
    out = jax.block_until_ready(out)

    ref = _reference_forward(params, video_feature, audio_feature,
                             video_cfg, audio_cfg)
    assert out.shape == (B, T)
    assert jnp.allclose(out, ref, atol=1e-5, rtol=1e-5), "mismatch vs reference"

    print("KERNEL_OK")
</pallas_src>

<mosaic_0001>
module attributes {stable_mosaic.version = 11 : i64} {
  func.func @_fusion_kernel(%arg0: i32, %arg1: memref<4xf32, #tpu.memory_space<smem>>, %arg2: memref<10x1xf32, #tpu.memory_space<vmem>>, %arg3: memref<12x1xf32, #tpu.memory_space<vmem>>, %arg4: memref<12x1xf32, #tpu.memory_space<vmem>>, %arg5: memref<10x1xf32, #tpu.memory_space<vmem>>, %arg6: memref<2x12x128xf32, #tpu.memory_space<vmem>>, %arg7: memref<2x10x128xf32, #tpu.memory_space<vmem>>, %arg8: memref<2x128xf32, #tpu.memory_space<vmem>>, %arg9: memref<2x128xf32, #tpu.memory_space<vmem>>, %arg10: memref<2x128xf32, #tpu.memory_space<vmem>>) attributes {dimension_semantics = [#tpu.dimension_semantics<parallel>], iteration_bounds = array<i64: 3>, scalar_prefetch = 0 : i64, scratch_operands = 0 : i64, tpu.core_type = #tpu.core_type<tc>, window_params = [{transform_indices = @transform_0, window_bounds = array<i64: 4>}, {pipeline_mode = #tpu.pipeline_mode<synchronous>, transform_indices = @transform_1, window_bounds = array<i64: 10, 1>}, {pipeline_mode = #tpu.pipeline_mode<synchronous>, transform_indices = @transform_2, window_bounds = array<i64: 12, 1>}, {pipeline_mode = #tpu.pipeline_mode<synchronous>, transform_indices = @transform_3, window_bounds = array<i64: 12, 1>}, {pipeline_mode = #tpu.pipeline_mode<synchronous>, transform_indices = @transform_4, window_bounds = array<i64: 10, 1>}, {transform_indices = @transform_5, window_bounds = array<i64: 2, 12, 128>}, {transform_indices = @transform_6, window_bounds = array<i64: 2, 10, 128>}, {transform_indices = @transform_7, window_bounds = array<i64: 2, 128>}, {transform_indices = @transform_8, window_bounds = array<i64: 2, 128>}, {transform_indices = @transform_9, window_bounds = array<i64: 2, 128>}]} {
    %c0 = arith.constant 0 : index
    %c0_0 = arith.constant 0 : index
    %c0_1 = arith.constant 0 : index
    %0 = vector.load %arg6[%c0, %c0_0, %c0_1] : memref<2x12x128xf32, #tpu.memory_space<vmem>>, vector<2x12x128xf32>
    %c0_2 = arith.constant 0 : index
    %c0_3 = arith.constant 0 : index
    %c0_4 = arith.constant 0 : index
    %1 = vector.load %arg7[%c0_2, %c0_3, %c0_4] : memref<2x10x128xf32, #tpu.memory_space<vmem>>, vector<2x10x128xf32>
    %c0_5 = arith.constant 0 : index
    %c0_6 = arith.constant 0 : index
    %2 = vector.load %arg8[%c0_5, %c0_6] : memref<2x128xf32, #tpu.memory_space<vmem>>, vector<2x128xf32>
    %c0_7 = arith.constant 0 : index
    %c0_8 = arith.constant 0 : index
    %3 = vector.load %arg9[%c0_7, %c0_8] : memref<2x128xf32, #tpu.memory_space<vmem>>, vector<2x128xf32>
    %c0_9 = arith.constant 0 : index
    %c0_10 = arith.constant 0 : index
    %4 = vector.load %arg2[%c0_9, %c0_10] : memref<10x1xf32, #tpu.memory_space<vmem>>, vector<10x1xf32>
    %5 = vector.shape_cast %4 : vector<10x1xf32> to vector<1x10x1xf32>
    %6 = vector.broadcast %5 : vector<1x10x1xf32> to vector<2x10x128xf32>
    %7 = arith.mulf %1, %6 : vector<2x10x128xf32>
    %cst = arith.constant dense<0.000000e+00> : vector<2x128xf32>
    %8 = vector.multi_reduction <add>, %7, %cst [1] : vector<2x10x128xf32> to vector<2x128xf32>
    %c0_11 = arith.constant 0 : index
    %c0_12 = arith.constant 0 : index
    %9 = vector.load %arg3[%c0_11, %c0_12] : memref<12x1xf32, #tpu.memory_space<vmem>>, vector<12x1xf32>
    %10 = vector.shape_cast %9 : vector<12x1xf32> to vector<1x12x1xf32>
    %11 = vector.broadcast %10 : vector<1x12x1xf32> to vector<2x12x128xf32>
    %12 = arith.mulf %0, %11 : vector<2x12x128xf32>
    %cst_13 = arith.constant dense<0.000000e+00> : vector<2x128xf32>
    %13 = vector.multi_reduction <add>, %12, %cst_13 [1] : vector<2x12x128xf32> to vector<2x128xf32>
    %c0_14 = arith.constant 0 : index
    %14 = memref.load %arg1[%c0_14] : memref<4xf32, #tpu.memory_space<smem>>
    %15 = vector.broadcast %14 : f32 to vector<2x128xf32>
    %16 = arith.mulf %3, %15 : vector<2x128xf32>
    %c1 = arith.constant 1 : index
    %17 = memref.load %arg1[%c1] : memref<4xf32, #tpu.memory_space<smem>>
    %18 = vector.broadcast %17 : f32 to vector<2x128xf32>
    %19 = arith.addf %16, %18 : vector<2x128xf32>
    %20 = arith.addf %19, %8 : vector<2x128xf32>
    %21 = arith.addf %20, %13 : vector<2x128xf32>
    %22 = arith.negf %21 : vector<2x128xf32>
    %23 = math.exp %22 : vector<2x128xf32>
    %cst_15 = arith.constant 1.000000e+00 : f32
    %24 = vector.broadcast %cst_15 : f32 to vector<2x128xf32>
    %25 = arith.addf %24, %23 : vector<2x128xf32>
    %26 = arith.divf %24, %25 : vector<2x128xf32>
    %c0_16 = arith.constant 0 : index
    %c0_17 = arith.constant 0 : index
    %27 = vector.load %arg4[%c0_16, %c0_17] : memref<12x1xf32, #tpu.memory_space<vmem>>, vector<12x1xf32>
    %28 = vector.shape_cast %27 : vector<12x1xf32> to vector<1x12x1xf32>
    %29 = vector.broadcast %28 : vector<1x12x1xf32> to vector<2x12x128xf32>
    %30 = arith.mulf %0, %29 : vector<2x12x128xf32>
    %cst_18 = arith.constant dense<0.000000e+00> : vector<2x128xf32>
    %31 = vector.multi_reduction <add>, %30, %cst_18 [1] : vector<2x12x128xf32> to vector<2x128xf32>
    %c0_19 = arith.constant 0 : index
    %c0_20 = arith.constant 0 : index
    %32 = vector.load %arg5[%c0_19, %c0_20] : memref<10x1xf32, #tpu.memory_space<vmem>>, vector<10x1xf32>
    %33 = vector.shape_cast %32 : vector<10x1xf32> to vector<1x10x1xf32>
    %34 = vector.broadcast %33 : vector<1x10x1xf32> to vector<2x10x128xf32>
    %35 = arith.mulf %1, %34 : vector<2x10x128xf32>
    %cst_21 = arith.constant dense<0.000000e+00> : vector<2x128xf32>
    %36 = vector.multi_reduction <add>, %35, %cst_21 [1] : vector<2x10x128xf32> to vector<2x128xf32>
    %c2 = arith.constant 2 : index
    %37 = memref.load %arg1[%c2] : memref<4xf32, #tpu.memory_space<smem>>
    %38 = vector.broadcast %37 : f32 to vector<2x128xf32>
    %39 = arith.mulf %2, %38 : vector<2x128xf32>
    %c3 = arith.constant 3 : index
    %40 = memref.load %arg1[%c3] : memref<4xf32, #tpu.memory_space<smem>>
    %41 = vector.broadcast %40 : f32 to vector<2x128xf32>
    %42 = arith.addf %39, %41 : vector<2x128xf32>
    %43 = arith.addf %42, %31 : vector<2x128xf32>
    %44 = arith.addf %43, %36 : vector<2x128xf32>
    %45 = arith.negf %44 : vector<2x128xf32>
    %46 = math.exp %45 : vector<2x128xf32>
    %cst_22 = arith.constant 1.000000e+00 : f32
    %47 = vector.broadcast %cst_22 : f32 to vector<2x128xf32>
    %48 = arith.addf %47, %46 : vector<2x128xf32>
    %49 = arith.divf %47, %48 : vector<2x128xf32>
    %50 = arith.addf %26, %49 : vector<2x128xf32>
    %51 = tpu.reciprocal %50 : vector<2x128xf32> -> vector<2x128xf32>
    %52 = arith.mulf %2, %49 : vector<2x128xf32>
    %53 = arith.mulf %3, %26 : vector<2x128xf32>
    %54 = arith.addf %52, %53 : vector<2x128xf32>
    %55 = arith.mulf %54, %51 : vector<2x128xf32>
    %c0_23 = arith.constant 0 : index
    %c0_24 = arith.constant 0 : index
    %56 = vector.load %arg10[%c0_23, %c0_24] : memref<2x128xf32, #tpu.memory_space<vmem>>, vector<2x128xf32>
    tpu.vector_store %arg10[%c0_23, %c0_24], %55 {strides = array<i32>} : memref<2x128xf32, #tpu.memory_space<vmem>>, vector<2x128xf32>,
    return
  }
  func.func @transform_0(%arg0: i32) -> i32 {
    %c0_i32 = arith.constant 0 : i32
    %c0_i32_0 = arith.constant 0 : i32
    return %c0_i32 : i32
  }
  func.func @transform_1(%arg0: i32) -> (i32, i32) {
    %c0_i32 = arith.constant 0 : i32
    %c0_i32_0 = arith.constant 0 : i32
    %c0_i32_1 = arith.constant 0 : i32
    return %c0_i32, %c0_i32_0 : i32, i32
  }
  func.func @transform_2(%arg0: i32) -> (i32, i32) {
    %c0_i32 = arith.constant 0 : i32
    %c0_i32_0 = arith.constant 0 : i32
    %c0_i32_1 = arith.constant 0 : i32
    return %c0_i32, %c0_i32_0 : i32, i32
  }
  func.func @transform_3(%arg0: i32) -> (i32, i32) {
    %c0_i32 = arith.constant 0 : i32
    %c0_i32_0 = arith.constant 0 : i32
    %c0_i32_1 = arith.constant 0 : i32
    return %c0_i32, %c0_i32_0 : i32, i32
  }
  func.func @transform_4(%arg0: i32) -> (i32, i32) {
    %c0_i32 = arith.constant 0 : i32
    %c0_i32_0 = arith.constant 0 : i32
    %c0_i32_1 = arith.constant 0 : i32
    return %c0_i32, %c0_i32_0 : i32, i32
  }
  func.func @transform_5(%arg0: i32) -> (i32, i32, i32) {
    %c0_i32 = arith.constant 0 : i32
    %c0_i32_0 = arith.constant 0 : i32
    %c0_i32_1 = arith.constant 0 : i32
    return %c0_i32, %c0_i32_0, %arg0 : i32, i32, i32
  }
  func.func @transform_6(%arg0: i32) -> (i32, i32, i32) {
    %c0_i32 = arith.constant 0 : i32
    %c0_i32_0 = arith.constant 0 : i32
    %c0_i32_1 = arith.constant 0 : i32
    return %c0_i32, %c0_i32_0, %arg0 : i32, i32, i32
  }
  func.func @transform_7(%arg0: i32) -> (i32, i32) {
    %c0_i32 = arith.constant 0 : i32
    %c0_i32_0 = arith.constant 0 : i32
    return %c0_i32, %arg0 : i32, i32
  }
  func.func @transform_8(%arg0: i32) -> (i32, i32) {
    %c0_i32 = arith.constant 0 : i32
    %c0_i32_0 = arith.constant 0 : i32
    return %c0_i32, %arg0 : i32, i32
  }
  func.func @transform_9(%arg0: i32) -> (i32, i32) {
    %c0_i32 = arith.constant 0 : i32
    %c0_i32_0 = arith.constant 0 : i32
    return %c0_i32, %arg0 : i32, i32
  }
}

</mosaic_0001>

<llo_original>
// kernel: tpu_custom_call.1
$region0: #{tpu_custom_call.1}
  #allocation0 [shape = 'u32[]', space=smem, size = 0x4, offset = 0x4, fixed_abs, tag = 'smem constant byte address 0x4 - core index']
  #allocation1 [shape = 'u32[144,128]{1,0:T(1,128)}', space=vmem, size = 0x12000, scoped, tag = 'internal scratch']
  %s0 = inlined_call_operand.vmem [shape: f32[4], index: 0, kind: input, shape index: {}]
  %s1 = inlined_call_operand.vmem [shape: f32[10,1], index: 1, kind: input, shape index: {}]
  %s2 = inlined_call_operand.vmem [shape: f32[12,1], index: 2, kind: input, shape index: {}]
  %s3 = inlined_call_operand.vmem [shape: f32[12,1], index: 3, kind: input, shape index: {}]
  %s4 = inlined_call_operand.vmem [shape: f32[10,1], index: 4, kind: input, shape index: {}]
  %s5 = inlined_call_operand.vmem [shape: f32[2,12,384], index: 5, kind: input, shape index: {}]
  %s6 = inlined_call_operand.vmem [shape: f32[2,10,384], index: 6, kind: input, shape index: {}]
  %s7 = inlined_call_operand.vmem [shape: f32[2,384], index: 7, kind: input, shape index: {}]
  %s8 = inlined_call_operand.vmem [shape: f32[2,384], index: 8, kind: input, shape index: {}]
  %s9 = inlined_call_operand.hbm [shape: f32[2,384], index: 9, kind: output, shape index: {}]
  %s10 = sld [smem:[#allocation0]]
  $region149: #{tpu_custom_call.1} parent=0
    _
  %s12 = ssub.s32 1, %s10
  %s13 = scalar_select 0, %s12, %s10
  $region1: #{tpu_custom_call.1} parent=0
    #allocation2 [shape = 'u8[512]{0}', space=smem, size = 0x200, scoped, tag = 'input window, operand 0, single buffered']
    #allocation3 [shape = 's32[2]{0}', space=sflag, size = 0x8, scoped, tag = 'scoped memory for tpu_custom_call.1']
    #allocation4 [shape = 's32[2]{0}', space=sflag, size = 0x8, scoped, tag = 'scoped memory for tpu_custom_call.1']
    #allocation5 [shape = 'u8[32768]{0}', space=vmem, size = 0x8000, scoped, tag = 'input window, operand 5']
    #allocation6 [shape = 'u8[32768]{0}', space=vmem, size = 0x8000, scoped, tag = 'input window, operand 6']
    #allocation7 [shape = 'u8[2048]{0}', space=vmem, size = 0x800, scoped, tag = 'output window, operand 0']
    %14 = vsyncpa [#allocation4], 0
    %15 = vsyncpa [#allocation3], 0
    %s16 = scalar_lea.sflag [#allocation3], 1
    %17 = vsyncpa %s16, 0
    loop: start=0, step=1, limit=5
    $region2: #{tpu_custom_call.1} parent=1 // loop_pre_header
      _
    $region3: #{tpu_custom_call.1} parent=1 // loop_header
      %s19 = sphi 0, %s23
      %p20 = scmp.ge.s32.totalorder %s19, 5
      %s27 = sphi 0, %s27
      %s29 = sphi 0, %s27
      %s30 = sphi 0, %s29
      %s44 = sphi 0, %s30
      %s48 = sphi 0, %s48
      %s50 = sphi 0, %s48
      %s51 = sphi 0, %s50
      %s65 = sphi 0, %s51
      %s69 = sphi 0, %s69
      %s71 = sphi 0, %s69
      %s72 = sphi 0, %s71
      %s86 = sphi 0, %s72
      %s90 = sphi 0, %s90
      %s92 = sphi 0, %s90
      %s93 = sphi 0, %s92
      %s107 = sphi 0, %s93
      %s111 = sphi 0, %s111
      %s113 = sphi 0, %s111
      %s114 = sphi 0, %s113
      %s128 = sphi 0, %s114
      %s134 = sphi 0, %s136
      %s137 = sphi 0, %s134
      %s138 = sphi 0, %s137
      %s154 = sphi 0, %s138
      %s160 = sphi 0, %s162
      %s163 = sphi 0, %s160
      %s164 = sphi 0, %s163
      %s180 = sphi 0, %s164
      %s186 = sphi 0, %s188
      %s189 = sphi 0, %s186
      %s190 = sphi 0, %s189
      %s206 = sphi 0, %s190
      %s212 = sphi 0, %s214
      %s215 = sphi 0, %s212
      %s216 = sphi 0, %s215
      %s232 = sphi 0, %s216
      %s238 = sphi 0, %s240
      %s241 = sphi 0, %s238
      %s242 = sphi 0, %s241
      %s258 = sphi 0, %s242
    $region4: #{tpu_custom_call.1} parent=1 // loop_header_branch
      %22 = sbr.rel (%p20) target = $region8
    $region5: #{tpu_custom_call.1} parent=1 // loop_body
      %s24 = ssub.s32 %s19, 1
      %s25 = ssub.s32 %s19, 2
      %s26 = sadd.s32 %s19, 1
      %s28 = sadd.s32 %s27, 1
      %p31 = scmp.eq.s32.totalorder %s19, 2
      %p32 = scmp.ne.s32.totalorder %s27, %s29
      %p33 = scmp.eq.s32.totalorder %s19, 0
      %p34 = por %p32, %p33
      %p35 = scmp.ne.s32.totalorder %s27, %s29
      %p36 = scmp.eq.s32.totalorder %s24, 2
      %p37 = por %p35, %p36
      %p38 = scmp.ne.s32.totalorder %s29, %s30
      %p39 = scmp.eq.s32.totalorder %s24, 0
      %p40 = por %p38, %p39
      %p41 = scmp.ne.s32.totalorder %s29, %s30
      %p42 = scmp.eq.s32.totalorder %s25, 2
      %p43 = por %p41, %p42
      %p45 = scmp.ne.s32.totalorder %s30, %s44
      %p46 = scmp.eq.s32.totalorder %s25, 0
      %p47 = por %p45, %p46
      %s49 = sadd.s32 %s48, 1
      %p52 = scmp.eq.s32.totalorder %s19, 2
      %p53 = scmp.ne.s32.totalorder %s48, %s50
      %p54 = scmp.eq.s32.totalorder %s19, 0
      %p55 = por %p53, %p54
      %p56 = scmp.ne.s32.totalorder %s48, %s50
      %p57 = scmp.eq.s32.totalorder %s24, 2
      %p58 = por %p56, %p57
      %p59 = scmp.ne.s32.totalorder %s50, %s51
      %p60 = scmp.eq.s32.totalorder %s24, 0
      %p61 = por %p59, %p60
      %p62 = scmp.ne.s32.totalorder %s50, %s51
      %p63 = scmp.eq.s32.totalorder %s25, 2
      %p64 = por %p62, %p63
      %p66 = scmp.ne.s32.totalorder %s51, %s65
      %p67 = scmp.eq.s32.totalorder %s25, 0
      %p68 = por %p66, %p67
      %s70 = sadd.s32 %s69, 1
      %p73 = scmp.eq.s32.totalorder %s19, 2
      %p74 = scmp.ne.s32.totalorder %s69, %s71
      %p75 = scmp.eq.s32.totalorder %s19, 0
      %p76 = por %p74, %p75
      %p77 = scmp.ne.s32.totalorder %s69, %s71
      %p78 = scmp.eq.s32.totalorder %s24, 2
      %p79 = por %p77, %p78
      %p80 = scmp.ne.s32.totalorder %s71, %s72
      %p81 = scmp.eq.s32.totalorder %s24, 0
      %p82 = por %p80, %p81
      %p83 = scmp.ne.s32.totalorder %s71, %s72
      %p84 = scmp.eq.s32.totalorder %s25, 2
      %p85 = por %p83, %p84
      %p87 = scmp.ne.s32.totalorder %s72, %s86
      %p88 = scmp.eq.s32.totalorder %s25, 0
      %p89 = por %p87, %p88
      %s91 = sadd.s32 %s90, 1
      %p94 = scmp.eq.s32.totalorder %s19, 2
      %p95 = scmp.ne.s32.totalorder %s90, %s92
      %p96 = scmp.eq.s32.totalorder %s19, 0
      %p97 = por %p95, %p96
      %p98 = scmp.ne.s32.totalorder %s90, %s92
      %p99 = scmp.eq.s32.totalorder %s24, 2
      %p100 = por %p98, %p99
      %p101 = scmp.ne.s32.totalorder %s92, %s93
      %p102 = scmp.eq.s32.totalorder %s24, 0
      %p103 = por %p101, %p102
      %p104 = scmp.ne.s32.totalorder %s92, %s93
      %p105 = scmp.eq.s32.totalorder %s25, 2
      %p106 = por %p104, %p105
      %p108 = scmp.ne.s32.totalorder %s93, %s107
      %p109 = scmp.eq.s32.totalorder %s25, 0
      %p110 = por %p108, %p109
      %s112 = sadd.s32 %s111, 1
      %p115 = scmp.eq.s32.totalorder %s19, 2
      %p116 = scmp.ne.s32.totalorder %s111, %s113
      %p117 = scmp.eq.s32.totalorder %s19, 0
      %p118 = por %p116, %p117
      %p119 = scmp.ne.s32.totalorder %s111, %s113
      %p120 = scmp.eq.s32.totalorder %s24, 2
      %p121 = por %p119, %p120
      %p122 = scmp.ne.s32.totalorder %s113, %s114
      %p123 = scmp.eq.s32.totalorder %s24, 0
      %p124 = por %p122, %p123
      %p125 = scmp.ne.s32.totalorder %s113, %s114
      %p126 = scmp.eq.s32.totalorder %s25, 2
      %p127 = por %p125, %p126
      %p129 = scmp.ne.s32.totalorder %s114, %s128
      %p130 = scmp.eq.s32.totalorder %s25, 0
      %p131 = por %p129, %p130
      %s132 = ssub.s32 %s19, %s26
      %p133 = scmp.eq.s32.totalorder %s132, 0
      %s135 = sadd.s32 %s134, 1
      %s136 = scalar_select %p133, %s134, %s135
      %p139 = pneg %p133
      %p140 = scmp.eq.s32.totalorder %s19, 2
      %p141 = por %p139, %p140
      %p142 = scmp.ne.s32.totalorder %s134, %s137
      %p143 = scmp.eq.s32.totalorder %s19, 0
      %p144 = por %p142, %p143
      %p145 = scmp.ne.s32.totalorder %s134, %s137
      %p146 = scmp.eq.s32.totalorder %s24, 2
      %p147 = por %p145, %p146
      %p148 = scmp.ne.s32.totalorder %s137, %s138
      %p149 = scmp.eq.s32.totalorder %s24, 0
      %p150 = por %p148, %p149
      %p151 = scmp.ne.s32.totalorder %s137, %s138
      %p152 = scmp.eq.s32.totalorder %s25, 2
      %p153 = por %p151, %p152
      %p155 = scmp.ne.s32.totalorder %s138, %s154
      %p156 = scmp.eq.s32.totalorder %s25, 0
      %p157 = por %p155, %p156
      %s158 = ssub.s32 %s19, %s26
      %p159 = scmp.eq.s32.totalorder %s158, 0
      %s161 = sadd.s32 %s160, 1
      %s162 = scalar_select %p159, %s160, %s161
      %p165 = pneg %p159
      %p166 = scmp.eq.s32.totalorder %s19, 2
      %p167 = por %p165, %p166
      %p168 = scmp.ne.s32.totalorder %s160, %s163
      %p169 = scmp.eq.s32.totalorder %s19, 0
      %p170 = por %p168, %p169
      %p171 = scmp.ne.s32.totalorder %s160, %s163
      %p172 = scmp.eq.s32.totalorder %s24, 2
      %p173 = por %p171, %p172
      %p174 = scmp.ne.s32.totalorder %s163, %s164
      %p175 = scmp.eq.s32.totalorder %s24, 0
      %p176 = por %p174, %p175
      %p177 = scmp.ne.s32.totalorder %s163, %s164
      %p178 = scmp.eq.s32.totalorder %s25, 2
      %p179 = por %p177, %p178
      %p181 = scmp.ne.s32.totalorder %s164, %s180
      %p182 = scmp.eq.s32.totalorder %s25, 0
      %p183 = por %p181, %p182
      %s184 = ssub.s32 %s19, %s26
      %p185 = scmp.eq.s32.totalorder %s184, 0
      %s187 = sadd.s32 %s186, 1
      %s188 = scalar_select %p185, %s186, %s187
      %p191 = pneg %p185
      %p192 = scmp.eq.s32.totalorder %s19, 2
      %p193 = por %p191, %p192
      %p194 = scmp.ne.s32.totalorder %s186, %s189
      %p195 = scmp.eq.s32.totalorder %s19, 0
      %p196 = por %p194, %p195
      %p197 = scmp.ne.s32.totalorder %s186, %s189
      %p198 = scmp.eq.s32.totalorder %s24, 2
      %p199 = por %p197, %p198
      %p200 = scmp.ne.s32.totalorder %s189, %s190
      %p201 = scmp.eq.s32.totalorder %s24, 0
      %p202 = por %p200, %p201
      %p203 = scmp.ne.s32.totalorder %s189, %s190
      %p204 = scmp.eq.s32.totalorder %s25, 2
      %p205 = por %p203, %p204
      %p207 = scmp.ne.s32.totalorder %s190, %s206
      %p208 = scmp.eq.s32.totalorder %s25, 0
      %p209 = por %p207, %p208
      %s210 = ssub.s32 %s19, %s26
      %p211 = scmp.eq.s32.totalorder %s210, 0
      %s213 = sadd.s32 %s212, 1
      %s214 = scalar_select %p211, %s212, %s213
      %p217 = pneg %p211
      %p218 = scmp.eq.s32.totalorder %s19, 2
      %p219 = por %p217, %p218
      %p220 = scmp.ne.s32.totalorder %s212, %s215
      %p221 = scmp.eq.s32.totalorder %s19, 0
      %p222 = por %p220, %p221
      %p223 = scmp.ne.s32.totalorder %s212, %s215
      %p224 = scmp.eq.s32.totalorder %s24, 2
      %p225 = por %p223, %p224
      %p226 = scmp.ne.s32.totalorder %s215, %s216
      %p227 = scmp.eq.s32.totalorder %s24, 0
      %p228 = por %p226, %p227
      %p229 = scmp.ne.s32.totalorder %s215, %s216
      %p230 = scmp.eq.s32.totalorder %s25, 2
      %p231 = por %p229, %p230
      %p233 = scmp.ne.s32.totalorder %s216, %s232
      %p234 = scmp.eq.s32.totalorder %s25, 0
      %p235 = por %p233, %p234
      %s236 = ssub.s32 %s19, %s26
      %p237 = scmp.eq.s32.totalorder %s236, 0
      %s239 = sadd.s32 %s238, 1
      %s240 = scalar_select %p237, %s238, %s239
      %p243 = pneg %p237
      %p244 = scmp.eq.s32.totalorder %s19, 2
      %p245 = por %p243, %p244
      %p246 = scmp.ne.s32.totalorder %s238, %s241
      %p247 = scmp.eq.s32.totalorder %s19, 0
      %p248 = por %p246, %p247
      %p249 = scmp.ne.s32.totalorder %s238, %s241
      %p250 = scmp.eq.s32.totalorder %s24, 2
      %p251 = por %p249, %p250
      %p252 = scmp.ne.s32.totalorder %s241, %s242
      %p253 = scmp.eq.s32.totalorder %s24, 0
      %p254 = por %p252, %p253
      %p255 = scmp.ne.s32.totalorder %s241, %s242
      %p256 = scmp.eq.s32.totalorder %s25, 2
      %p257 = por %p255, %p256
      %p259 = scmp.ne.s32.totalorder %s242, %s258
      %p260 = scmp.eq.s32.totalorder %s25, 0
      %p261 = por %p259, %p260
      %p262 = scmp.le.s32.totalorder 1, %s19
      %p263 = scmp.lt.s32.totalorder %s19, 4
      %p264 = pnand %p262, %p263
      %p265 = pneg %p264
      // Predicated region
      $region9: #{tpu_custom_call.1} parent=5 // pred_check
        _
      $region10: #{tpu_custom_call.1} parent=5 // pred_check_branch
        %267 = sbr.rel (%p264) target = $region12
      $region11: #{tpu_custom_call.1} parent=5 // pred_region
        %s268 = ssub.s32 %s19, 1
        // Predicated region
        $region13: #{tpu_custom_call.1} parent=11 // pred_check
          %p269 = pneg %p40
        $region14: #{tpu_custom_call.1} parent=11 // pred_check_branch
          %271 = sbr.rel (%p269) target = $region16
        $region15: #{tpu_custom_call.1} parent=11 // pred_region
          %s273 = ssub.s32 16, 16
          %274 = vsyncadd [#allocation4], %s273
          %s276 = sshll.u32 %s0, 4
          %s277 = int_to_ptr.vmem [resolvable:$true] %s276
          %279 = dma.vmem_to_smem %s277, 16, [#allocation2], [#allocation4]
        $region16: #{tpu_custom_call.1} parent=11 // pred_fallthru
          _
        // Predicated region
        $region17: #{tpu_custom_call.1} parent=11 // pred_check
          %p280 = pneg %p61
        $region18: #{tpu_custom_call.1} parent=11 // pred_check_branch
          %282 = sbr.rel (%p280) target = $region20
        $region19: #{tpu_custom_call.1} parent=11 // pred_region
          _
        $region20: #{tpu_custom_call.1} parent=11 // pred_fallthru
          _
        // Predicated region
        $region21: #{tpu_custom_call.1} parent=11 // pred_check
          %p283 = pneg %p82
        $region22: #{tpu_custom_call.1} parent=11 // pred_check_branch
          %285 = sbr.rel (%p283) target = $region24
        $region23: #{tpu_custom_call.1} parent=11 // pred_region
          _
        $region24: #{tpu_custom_call.1} parent=11 // pred_fallthru
          _
        // Predicated region
        $region25: #{tpu_custom_call.1} parent=11 // pred_check
          %p286 = pneg %p103
        $region26: #{tpu_custom_call.1} parent=11 // pred_check_branch
          %288 = sbr.rel (%p286) target = $region28
        $region27: #{tpu_custom_call.1} parent=11 // pred_region
          _
        $region28: #{tpu_custom_call.1} parent=11 // pred_fallthru
          _
        // Predicated region
        $region29: #{tpu_custom_call.1} parent=11 // pred_check
          %p289 = pneg %p124
        $region30: #{tpu_custom_call.1} parent=11 // pred_check_branch
          %291 = sbr.rel (%p289) target = $region32
        $region31: #{tpu_custom_call.1} parent=11 // pred_region
          _
        $region32: #{tpu_custom_call.1} parent=11 // pred_fallthru
          _
      $region12: #{tpu_custom_call.1} parent=5 // pred_fallthru
        _
      %p292 = scmp.lt.s32.totalorder %s19, 3
      // Predicated region
      $region33: #{tpu_custom_call.1} parent=5 // pred_check
        %p293 = pneg %p292
      $region34: #{tpu_custom_call.1} parent=5 // pred_check_branch
        %295 = sbr.rel (%p293) target = $region36
      $region35: #{tpu_custom_call.1} parent=5 // pred_region
        // Predicated region
        $region37: #{tpu_custom_call.1} parent=35 // pred_check
          %p296 = pneg %p144
        $region38: #{tpu_custom_call.1} parent=35 // pred_check_branch
          %298 = sbr.rel (%p296) target = $region40
        $region39: #{tpu_custom_call.1} parent=35 // pred_region
          %s299 = sand.u32 %s134, 1
          %s300 = sand.u32 %s134, 1
          %s301 = smul.addr %s300, 32
          %s302 = scalar_lea.vmem [#allocation5], %s301
          %s303 = smul.addr %s19, 8
          %s304 = scalar_lea.vmem %s5, %s303
          // Predicated region
          $region41: #{tpu_custom_call.1} parent=39 // pred_check
            _
          $region42: #{tpu_custom_call.1} parent=39 // pred_check_branch
            %306 = sbr.rel (0) target = $region44
          $region43: #{tpu_custom_call.1} parent=39 // pred_region
            // Predicated region
            $region45: #{tpu_custom_call.1} parent=43 // pred_check
              _
            $region46: #{tpu_custom_call.1} parent=43 // pred_check_branch
              %308 = sbr.rel (0) target = $region48
            $region47: #{tpu_custom_call.1} parent=43 // pred_region
              // Predicated region
              $region60: #{tpu_custom_call.1} parent=47 // pred_check
                _
              $region61: #{tpu_custom_call.1} parent=47 // pred_check_branch
                %330 = sbr.rel (0) target = $region63
              $region62: #{tpu_custom_call.1} parent=47 // pred_region
                loop: start=0, step=1, limit=1
                $region64: #{tpu_custom_call.1} parent=62 // loop_pre_header
                  _
                $region65: #{tpu_custom_call.1} parent=62 // loop_header
                  %s332 = sphi 0, %s336
                  %p333 = scmp.ge.s32.totalorder %s332, 1
                  %s337 = sphi %s304, %s304
                  %s338 = sphi %s302, %s302
                $region66: #{tpu_custom_call.1} parent=62 // loop_header_branch
                  %335 = sbr.rel (%p333) target = $region70
                $region67: #{tpu_custom_call.1} parent=62 // loop_body
                  %v339 = vld [vmem:[%s337] sm:$0xff]
                  %340 = vst [vmem:[%s338] sm:$0xff] %v339
                  %v341 = vld [vmem:[%s337 + $0x18] sm:$0xff]
                  %342 = vst [vmem:[%s338 + $0x8] sm:$0xff] %v341
                  %v343 = vld [vmem:[%s337 + $0x30] sm:$0xff]
                  %344 = vst [vmem:[%s338 + $0x10] sm:$0xff] %v343
                  %v345 = vld [vmem:[%s337 + $0x48] sm:$0xff]
                  %346 = vst [vmem:[%s338 + $0x18] sm:$0xff] %v345
                $region68: #{tpu_custom_call.1} parent=62 // loop_footer
                  %s336 = sadd.s32 1, %s332
                $region69: #{tpu_custom_call.1} parent=62 // loop_footer_branch
                  %331 = sbr.rel target = $region65
                $region70: #{tpu_custom_call.1} parent=62 // loop_exit
                  _
              $region63: #{tpu_custom_call.1} parent=47 // pred_fallthru
                _
              // Predicated region
              $region71: #{tpu_custom_call.1} parent=47 // pred_check
                _
              $region72: #{tpu_custom_call.1} parent=47 // pred_check_branch
                %348 = sbr.rel target = $region74
              $region73: #{tpu_custom_call.1} parent=47 // pred_region
                _
              $region74: #{tpu_custom_call.1} parent=47 // pred_fallthru
                _
            $region48: #{tpu_custom_call.1} parent=43 // pred_fallthru
              _
            // Predicated region
            $region49: #{tpu_custom_call.1} parent=43 // pred_check
              _
            $region50: #{tpu_custom_call.1} parent=43 // pred_check_branch
              %310 = sbr.rel target = $region52
            $region51: #{tpu_custom_call.1} parent=43 // pred_region
              %s312 = ssub.s32 256, 1
              loop: start=0, step=1, limit=1
              $region53: #{tpu_custom_call.1} parent=51 // loop_pre_header
                _
              $region54: #{tpu_custom_call.1} parent=51 // loop_header
                %s314 = sphi 0, %s318
                %p315 = scmp.ge.s32.totalorder %s314, 1
                %s319 = sphi %s304, %s304
                %s320 = sphi %s302, %s302
              $region55: #{tpu_custom_call.1} parent=51 // loop_header_branch
                %317 = sbr.rel (%p315) target = $region59
              $region56: #{tpu_custom_call.1} parent=51 // loop_body
                %v321 = vld [vmem:[%s319] sm:%s312]
                %322 = vst [vmem:[%s320] sm:%s312] %v321
                %v323 = vld [vmem:[%s319 + $0x18] sm:%s312]
                %324 = vst [vmem:[%s320 + $0x8] sm:%s312] %v323
                %v325 = vld [vmem:[%s319 + $0x30] sm:%s312]
                %326 = vst [vmem:[%s320 + $0x10] sm:%s312] %v325
                %v327 = vld [vmem:[%s319 + $0x48] sm:%s312]
                %328 = vst [vmem:[%s320 + $0x18] sm:%s312] %v327
              $region57: #{tpu_custom_call.1} parent=51 // loop_footer
                %s318 = sadd.s32 1, %s314
              $region58: #{tpu_custom_call.1} parent=51 // loop_footer_branch
                %313 = sbr.rel target = $region54
              $region59: #{tpu_custom_call.1} parent=51 // loop_exit
                _
            $region52: #{tpu_custom_call.1} parent=43 // pred_fallthru
              _
          $region44: #{tpu_custom_call.1} parent=39 // pred_fallthru
            _
          %349 = vnop
        $region40: #{tpu_custom_call.1} parent=35 // pred_fallthru
          _
        // Predicated region
        $region75: #{tpu_custom_call.1} parent=35 // pred_check
          %p350 = pneg %p170
        $region76: #{tpu_custom_call.1} parent=35 // pred_check_branch
          %352 = sbr.rel (%p350) target = $region78
        $region77: #{tpu_custom_call.1} parent=35 // pred_region
          %s353 = sand.u32 %s160, 1
          %s354 = sand.u32 %s160, 1
          %s355 = smul.addr %s354, 32
          %s356 = scalar_lea.vmem [#allocation6], %s355
          %s357 = smul.addr %s19, 8
          %s358 = scalar_lea.vmem %s6, %s357
          // Predicated region
          $region79: #{tpu_custom_call.1} parent=77 // pred_check
            _
          $region80: #{tpu_custom_call.1} parent=77 // pred_check_branch
            %360 = sbr.rel (0) target = $region82
          $region81: #{tpu_custom_call.1} parent=77 // pred_region
            // Predicated region
            $region83: #{tpu_custom_call.1} parent=81 // pred_check
              _
            $region84: #{tpu_custom_call.1} parent=81 // pred_check_branch
              %362 = sbr.rel (0) target = $region86
            $region85: #{tpu_custom_call.1} parent=81 // pred_region
              // Predicated region
              $region98: #{tpu_custom_call.1} parent=85 // pred_check
                _
              $region99: #{tpu_custom_call.1} parent=85 // pred_check_branch
                %384 = sbr.rel (0) target = $region101
              $region100: #{tpu_custom_call.1} parent=85 // pred_region
                loop: start=0, step=1, limit=1
                $region102: #{tpu_custom_call.1} parent=100 // loop_pre_header
                  _
                $region103: #{tpu_custom_call.1} parent=100 // loop_header
                  %s386 = sphi 0, %s390
                  %p387 = scmp.ge.s32.totalorder %s386, 1
                  %s391 = sphi %s358, %s358
                  %s392 = sphi %s356, %s356
                $region104: #{tpu_custom_call.1} parent=100 // loop_header_branch
                  %389 = sbr.rel (%p387) target = $region108
                $region105: #{tpu_custom_call.1} parent=100 // loop_body
                  %v393 = vld [vmem:[%s391] sm:$0xff]
                  %394 = vst [vmem:[%s392] sm:$0xff] %v393
                  %v395 = vld [vmem:[%s391 + $0x18] sm:$0xff]
                  %396 = vst [vmem:[%s392 + $0x8] sm:$0xff] %v395
                  %v397 = vld [vmem:[%s391 + $0x30] sm:$0xff]
                  %398 = vst [vmem:[%s392 + $0x10] sm:$0xff] %v397
                  %v399 = vld [vmem:[%s391 + $0x48] sm:$0xff]
                  %400 = vst [vmem:[%s392 + $0x18] sm:$0xff] %v399
                $region106: #{tpu_custom_call.1} parent=100 // loop_footer
                  %s390 = sadd.s32 1, %s386
                $region107: #{tpu_custom_call.1} parent=100 // loop_footer_branch
                  %385 = sbr.rel target = $region103
                $region108: #{tpu_custom_call.1} parent=100 // loop_exit
                  _
              $region101: #{tpu_custom_call.1} parent=85 // pred_fallthru
                _
              // Predicated region
              $region109: #{tpu_custom_call.1} parent=85 // pred_check
                _
              $region110: #{tpu_custom_call.1} parent=85 // pred_check_branch
                %402 = sbr.rel target = $region112
              $region111: #{tpu_custom_call.1} parent=85 // pred_region
                _
              $region112: #{tpu_custom_call.1} parent=85 // pred_fallthru
                _
            $region86: #{tpu_custom_call.1} parent=81 // pred_fallthru
              _
            // Predicated region
            $region87: #{tpu_custom_call.1} parent=81 // pred_check
              _
            $region88: #{tpu_custom_call.1} parent=81 // pred_check_branch
              %364 = sbr.rel target = $region90
            $region89: #{tpu_custom_call.1} parent=81 // pred_region
              %s366 = ssub.s32 256, 1
              loop: start=0, step=1, limit=1
              $region91: #{tpu_custom_call.1} parent=89 // loop_pre_header
                _
              $region92: #{tpu_custom_call.1} parent=89 // loop_header
                %s368 = sphi 0, %s372
                %p369 = scmp.ge.s32.totalorder %s368, 1
                %s373 = sphi %s358, %s358
                %s374 = sphi %s356, %s356
              $region93: #{tpu_custom_call.1} parent=89 // loop_header_branch
                %371 = sbr.rel (%p369) target = $region97
              $region94: #{tpu_custom_call.1} parent=89 // loop_body
                %v375 = vld [vmem:[%s373] sm:%s366]
                %376 = vst [vmem:[%s374] sm:%s366] %v375
                %v377 = vld [vmem:[%s373 + $0x18] sm:%s366]
                %378 = vst [vmem:[%s374 + $0x8] sm:%s366] %v377
                %v379 = vld [vmem:[%s373 + $0x30] sm:%s366]
                %380 = vst [vmem:[%s374 + $0x10] sm:%s366] %v379
                %v381 = vld [vmem:[%s373 + $0x48] sm:%s366]
                %382 = vst [vmem:[%s374 + $0x18] sm:%s366] %v381
              $region95: #{tpu_custom_call.1} parent=89 // loop_footer
                %s372 = sadd.s32 1, %s368
              $region96: #{tpu_custom_call.1} parent=89 // loop_footer_branch
                %367 = sbr.rel target = $region92
              $region97: #{tpu_custom_call.1} parent=89 // loop_exit
                _
            $region90: #{tpu_custom_call.1} parent=81 // pred_fallthru
              _
          $region82: #{tpu_custom_call.1} parent=77 // pred_fallthru
            _
          %403 = vnop
        $region78: #{tpu_custom_call.1} parent=35 // pred_fallthru
          _
        // Predicated region
        $region113: #{tpu_custom_call.1} parent=35 // pred_check
          %p404 = pneg %p196
        $region114: #{tpu_custom_call.1} parent=35 // pred_check_branch
          %406 = sbr.rel (%p404) target = $region116
        $region115: #{tpu_custom_call.1} parent=35 // pred_region
          %p407 = scmp.lt.s32.totalorder %s19, 2
          %s408 = scalar_select %p407, %s19, 2
          %s409 = smul.addr %s408, 2
          %s410 = scalar_lea.vmem %s7, %s409
        $region116: #{tpu_custom_call.1} parent=35 // pred_fallthru
          _
        // Predicated region
        $region117: #{tpu_custom_call.1} parent=35 // pred_check
          %p411 = pneg %p222
        $region118: #{tpu_custom_call.1} parent=35 // pred_check_branch
          %413 = sbr.rel (%p411) target = $region120
        $region119: #{tpu_custom_call.1} parent=35 // pred_region
          %p414 = scmp.lt.s32.totalorder %s19, 2
          %s415 = scalar_select %p414, %s19, 2
          %s416 = smul.addr %s415, 2
          %s417 = scalar_lea.vmem %s8, %s416
        $region120: #{tpu_custom_call.1} parent=35 // pred_fallthru
          _
      $region36: #{tpu_custom_call.1} parent=5 // pred_fallthru
        _
      %p418 = scmp.le.s32.totalorder 1, %s19
      %p419 = scmp.lt.s32.totalorder %s19, 4
      %p420 = pnand %p418, %p419
      %p421 = pneg %p420
      // Predicated region
      $region121: #{tpu_custom_call.1} parent=5 // pred_check
        _
      $region122: #{tpu_custom_call.1} parent=5 // pred_check_branch
        %423 = sbr.rel (%p420) target = $region124
      $region123: #{tpu_custom_call.1} parent=5 // pred_region
        %s424 = ssub.s32 %s19, 1
        // Predicated region
        $region125: #{tpu_custom_call.1} parent=123 // pred_check
          %p425 = pneg %p40
        $region126: #{tpu_custom_call.1} parent=123 // pred_check_branch
          %427 = sbr.rel (%p425) target = $region128
        $region127: #{tpu_custom_call.1} parent=123 // pred_region
          %428 = dma.done [#allocation4], 16
        $region128: #{tpu_custom_call.1} parent=123 // pred_fallthru
          _
        %s429 = sand.u32 %s137, 1
        %s430 = sand.u32 %s137, 1
        %s431 = smul.addr %s430, 32
        %s432 = scalar_lea.vmem [#allocation5], %s431
        // Predicated region
        $region129: #{tpu_custom_call.1} parent=123 // pred_check
          %p433 = pneg %p150
        $region130: #{tpu_custom_call.1} parent=123 // pred_check_branch
          %435 = sbr.rel (%p433) target = $region132
        $region131: #{tpu_custom_call.1} parent=123 // pred_region
          _
        $region132: #{tpu_custom_call.1} parent=123 // pred_fallthru
          _
        %s436 = sand.u32 %s163, 1
        %s437 = sand.u32 %s163, 1
        %s438 = smul.addr %s437, 32
        %s439 = scalar_lea.vmem [#allocation6], %s438
        // Predicated region
        $region133: #{tpu_custom_call.1} parent=123 // pred_check
          %p440 = pneg %p176
        $region134: #{tpu_custom_call.1} parent=123 // pred_check_branch
          %442 = sbr.rel (%p440) target = $region136
        $region135: #{tpu_custom_call.1} parent=123 // pred_region
          _
        $region136: #{tpu_custom_call.1} parent=123 // pred_fallthru
          _
        %443 = sfence
        %p444 = pneg %p40
        %p445 = pneg %p37
        %p446 = pneg %p61
        %p447 = pneg %p58
        %p448 = pneg %p82
        %p449 = pneg %p79
        %p450 = pneg %p103
        %p451 = pneg %p100
        %p452 = pneg %p124
        %p453 = pneg %p121
        %s454 = sand.u32 %s137, 1
        %s455 = sand.u32 %s137, 1
        %s456 = smul.addr %s455, 32
        %s457 = scalar_lea.vmem [#allocation5], %s456
        %p458 = pneg %p150
        %p459 = pneg %p147
        %s460 = sand.u32 %s163, 1
        %s461 = sand.u32 %s163, 1
        %s462 = smul.addr %s461, 32
        %s463 = scalar_lea.vmem [#allocation6], %s462
        %p464 = pneg %p176
        %p465 = pneg %p173
        %p466 = scmp.lt.s32.totalorder %s24, 2
        %s467 = scalar_select %p466, %s24, 2
        %s468 = smul.addr %s467, 2
        %s469 = scalar_lea.vmem %s7, %s468
        %p470 = pneg %p202
        %p471 = pneg %p199
        %p472 = scmp.lt.s32.totalorder %s24, 2
        %s473 = scalar_select %p472, %s24, 2
        %s474 = smul.addr %s473, 2
        %s475 = scalar_lea.vmem %s8, %s474
        %p476 = pneg %p228
        %p477 = pneg %p225
        %p478 = pneg %p254
        %p479 = pneg %p251
        %s480 = sand.u32 %s241, 1
        %s481 = scalar_lea.sflag [#allocation3], %s480
        %s482 = sand.u32 %s241, 1
        %s483 = smul.addr %s482, 2
        %s484 = scalar_lea.vmem [#allocation7], %s483
        %p485 = scmp.lt.s32.totalorder %s24, 2
        %s486 = scalar_select %p485, %s24, 2
        %s487 = smul.addr %s486, 2
        %s488 = scalar_lea.vmem %s7, %s487
        %p489 = scmp.lt.s32.totalorder %s24, 2
        %s490 = scalar_select %p489, %s24, 2
        %s491 = smul.addr %s490, 2
        %s492 = scalar_lea.vmem %s8, %s491
        %v493 = vld [vmem:[%s432] sm:$0xff]
        %v494 = vld [vmem:[%s432 + $0x8] sm:$0xf]
        %v495 = vld [vmem:[%s432 + $0x10] sm:$0xff]
        %v496 = vld [vmem:[%s432 + $0x18] sm:$0xf]
        %v497 = vld [vmem:[%s439] sm:$0xff]
        %v498 = vld [vmem:[%s439 + $0x8] sm:$0x3]
        %v499 = vld [vmem:[%s439 + $0x10] sm:$0xff]
        %v500 = vld [vmem:[%s439 + $0x18] sm:$0x3]
        %v501 = vld [vmem:[%s488] sm:$0x3]
        %v502 = vld [vmem:[%s492] sm:$0x3]
        %v503 = vld [vmem:[%s1] sm:$0xff]
        %v504 = vld [vmem:[%s1 + $0x8] sm:$0x3]
        %506 = vset.pattern.permute.xlu0 0
        %507 = vperm.xlu0 %506, %v503
        %v508 = vpop.permute.xlu0 %507
        %511 = vset.pattern.permute.xlu0 0
        %512 = vperm.xlu0 %511, %v504
        %v513 = vpop.permute.xlu0 %512
        %v515 = vmul.f32 %v497, %v508
        %v516 = vmul.f32 %v498, %v513
        %v517 = vmul.f32 %v499, %v508
        %v518 = vmul.f32 %v500, %v513
        %vm519 = vcmask 1041408
        %v520 = vsel %vm519, %v516, 0.0
        %v521 = vadd.f32 %v515, %v520
        %v522 = vrot.slane %v521, 4
        %v523 = vadd.f32 %v521, %v522
        %v524 = vrot.slane %v523, 2
        %v525 = vadd.f32 %v523, %v524
        %v526 = vrot.slane %v525, 1
        %v527 = vadd.f32 %v525, %v526
        %v528 = vsel %vm519, %v518, 0.0
        %v529 = vadd.f32 %v517, %v528
        %v530 = vrot.slane %v529, 4
        %v531 = vadd.f32 %v529, %v530
        %v532 = vrot.slane %v531, 2
        %v533 = vadd.f32 %v531, %v532
        %v534 = vrot.slane %v533, 1
        %v535 = vadd.f32 %v533, %v534
        %v536 = vld [vmem:[%s2] sm:$0xff]
        %v537 = vld [vmem:[%s2 + $0x8] sm:$0xf]
        %539 = vset.pattern.permute.xlu0 0
        %540 = vperm.xlu0 %539, %v536
        %v541 = vpop.permute.xlu0 %540
        %544 = vset.pattern.permute.xlu0 0
        %545 = vperm.xlu0 %544, %v537
        %v546 = vpop.permute.xlu0 %545
        %v548 = vmul.f32 %v493, %v541
        %v549 = vmul.f32 %v494, %v546
        %v550 = vmul.f32 %v495, %v541
        %v551 = vmul.f32 %v496, %v546
        %vm552 = vcmask 1043456
        %v553 = vsel %vm552, %v549, 0.0
        %v554 = vadd.f32 %v548, %v553
        %v555 = vrot.slane %v554, 4
        %v556 = vadd.f32 %v554, %v555
        %v557 = vrot.slane %v556, 2
        %v558 = vadd.f32 %v556, %v557
        %v559 = vrot.slane %v558, 1
        %v560 = vadd.f32 %v558, %v559
        %v561 = vsel %vm552, %v551, 0.0
        %v562 = vadd.f32 %v550, %v561
        %v563 = vrot.slane %v562, 4
        %v564 = vadd.f32 %v562, %v563
        %v565 = vrot.slane %v564, 2
        %v566 = vadd.f32 %v564, %v565
        %v567 = vrot.slane %v566, 1
        %v568 = vadd.f32 %v566, %v567
        %s569 = sld [smem:[#allocation2]]
        %v570 = vstv %s569
        %v571 = vmul.f32 %v502, %v570
        %s572 = sld [smem:[#allocation2 + $0x1]]
        %v573 = vstv %s572
        %v574 = vadd.f32 %v571, %v573
        %vm577 = vcmask 1041409
        %v578 = vsel %vm577, %v535, %v527
        %v580 = vadd.f32 %v574, %v578
        %v583 = vsel %vm577, %v568, %v560
        %v585 = vadd.f32 %v580, %v583
        %v586 = vxor.u32 %v585, 2147483648
        %v587 = vmul.f32 %v586, 1.442695
        %v588 = vpow.pop %v587
        %v589 = vadd.f32 %v588, 1.0
        %v590 = vrcp.pop %v589
        %v591 = vmul.f32 1.0, %v590
        %v592 = vld [vmem:[%s3] sm:$0xff]
        %v593 = vld [vmem:[%s3 + $0x8] sm:$0xf]
        %595 = vset.pattern.permute.xlu0 0
        %596 = vperm.xlu0 %595, %v592
        %v597 = vpop.permute.xlu0 %596
        %600 = vset.pattern.permute.xlu0 0
        %601 = vperm.xlu0 %600, %v593
        %v602 = vpop.permute.xlu0 %601
        %v604 = vmul.f32 %v493, %v597
        %v605 = vmul.f32 %v494, %v602
        %v606 = vmul.f32 %v495, %v597
        %v607 = vmul.f32 %v496, %v602
        %v608 = vsel %vm552, %v605, 0.0
        %v609 = vadd.f32 %v604, %v608
        %v610 = vrot.slane %v609, 4
        %v611 = vadd.f32 %v609, %v610
        %v612 = vrot.slane %v611, 2
        %v613 = vadd.f32 %v611, %v612
        %v614 = vrot.slane %v613, 1
        %v615 = vadd.f32 %v613, %v614
        %v616 = vsel %vm552, %v607, 0.0
        %v617 = vadd.f32 %v606, %v616
        %v618 = vrot.slane %v617, 4
        %v619 = vadd.f32 %v617, %v618
        %v620 = vrot.slane %v619, 2
        %v621 = vadd.f32 %v619, %v620
        %v622 = vrot.slane %v621, 1
        %v623 = vadd.f32 %v621, %v622
        %v624 = vld [vmem:[%s4] sm:$0xff]
        %v625 = vld [vmem:[%s4 + $0x8] sm:$0x3]
        %627 = vset.pattern.permute.xlu0 0
        %628 = vperm.xlu0 %627, %v624
        %v629 = vpop.permute.xlu0 %628
        %632 = vset.pattern.permute.xlu0 0
        %633 = vperm.xlu0 %632, %v625
        %v634 = vpop.permute.xlu0 %633
        %v636 = vmul.f32 %v497, %v629
        %v637 = vmul.f32 %v498, %v634
        %v638 = vmul.f32 %v499, %v629
        %v639 = vmul.f32 %v500, %v634
        %v640 = vsel %vm519, %v637, 0.0
        %v641 = vadd.f32 %v636, %v640
        %v642 = vrot.slane %v641, 4
        %v643 = vadd.f32 %v641, %v642
        %v644 = vrot.slane %v643, 2
        %v645 = vadd.f32 %v643, %v644
        %v646 = vrot.slane %v645, 1
        %v647 = vadd.f32 %v645, %v646
        %v648 = vsel %vm519, %v639, 0.0
        %v649 = vadd.f32 %v638, %v648
        %v650 = vrot.slane %v649, 4
        %v651 = vadd.f32 %v649, %v650
        %v652 = vrot.slane %v651, 2
        %v653 = vadd.f32 %v651, %v652
        %v654 = vrot.slane %v653, 1
        %v655 = vadd.f32 %v653, %v654
        %s656 = sld [smem:[#allocation2 + $0x2]]
        %v657 = vstv %s656
        %v658 = vmul.f32 %v501, %v657
        %s659 = sld [smem:[#allocation2 + $0x3]]
        %v660 = vstv %s659
        %v661 = vadd.f32 %v658, %v660
        %v664 = vsel %vm577, %v623, %v615
        %v666 = vadd.f32 %v661, %v664
        %v669 = vsel %vm577, %v655, %v647
        %v671 = vadd.f32 %v666, %v669
        %v672 = vxor.u32 %v671, 2147483648
        %v673 = vmul.f32 %v672, 1.442695
        %v674 = vpow.pop %v673
        %v675 = vadd.f32 %v674, 1.0
        %v676 = vrcp.pop %v675
        %v677 = vmul.f32 1.0, %v676
        %v678 = vadd.f32 %v591, %v677
        %v679 = vrcp.pop %v678
        %v680 = vmul.f32 %v501, %v677
        %v681 = vmul.f32 %v502, %v591
        %v682 = vadd.f32 %v680, %v681
        %v683 = vmul.f32 %v682, %v679
        %684 = vst [vmem:[%s484] sm:$0x3] %v683
        %s685 = sand.u32 %s241, 1
        %s686 = scalar_lea.sflag [#allocation3], %s685
        %s687 = sand.u32 %s241, 1
        %s688 = smul.addr %s687, 2
        %s689 = scalar_lea.vmem [#allocation7], %s688
        // Predicated region
        $region137: #{tpu_custom_call.1} parent=123 // pred_check
          %p690 = pneg %p251
        $region138: #{tpu_custom_call.1} parent=123 // pred_check_branch
          %692 = sbr.rel (%p690) target = $region140
        $region139: #{tpu_custom_call.1} parent=123 // pred_region
          %s694 = ssub.s32 32, 32
          %695 = vsyncadd %s686, %s694
          %s696 = smul.addr %s24, 32
          %s697 = scalar_lea.hbm %s9, %s696
          %s699 = sshll.u32 %s689, 4
          %s700 = int_to_ptr.vmem [resolvable:$true] %s699
          %702 = dma.vmem_to_hbm [thread:$0]  %s700, 32, %s697, %s686
        $region140: #{tpu_custom_call.1} parent=123 // pred_fallthru
          _
      $region124: #{tpu_custom_call.1} parent=5 // pred_fallthru
        _
      %p703 = scmp.le.s32.totalorder 2, %s19
      // Predicated region
      $region141: #{tpu_custom_call.1} parent=5 // pred_check
        %p704 = pneg %p703
      $region142: #{tpu_custom_call.1} parent=5 // pred_check_branch
        %706 = sbr.rel (%p704) target = $region144
      $region143: #{tpu_custom_call.1} parent=5 // pred_region
        %s707 = ssub.s32 %s19, 2
        // Predicated region
        $region145: #{tpu_custom_call.1} parent=143 // pred_check
          %p708 = pneg %p257
        $region146: #{tpu_custom_call.1} parent=143 // pred_check_branch
          %710 = sbr.rel (%p708) target = $region148
        $region147: #{tpu_custom_call.1} parent=143 // pred_region
          %s711 = sand.u32 %s242, 1
          %s712 = scalar_lea.sflag [#allocation3], %s711
          %s713 = sand.u32 %s242, 1
          %s714 = smul.addr %s713, 2
          %s715 = scalar_lea.vmem [#allocation7], %s714
          %716 = dma.done %s712, 32
        $region148: #{tpu_custom_call.1} parent=143 // pred_fallthru
          _
      $region144: #{tpu_custom_call.1} parent=5 // pred_fallthru
        _
    $region6: #{tpu_custom_call.1} parent=1 // loop_footer
      %s23 = sadd.s32 1, %s19
    $region7: #{tpu_custom_call.1} parent=1 // loop_footer_branch
      %18 = sbr.rel target = $region3
    $region8: #{tpu_custom_call.1} parent=1 // loop_exit
      _
    %717 = vsyncpa [#allocation3], 1
    %s718 = scalar_lea.sflag [#allocation3], 1
    %719 = vsyncpa %s718, 1
    %720 = vsyncpa [#allocation4], 1
    %s721 = scalar_lea.sflag [#allocation4], 1
    %722 = vsyncpa %s721, 1

</llo_original>
